<compile_context>
chip_gen: v6e
topology: v6e:2x2x1
jax: 0.10.0
libtpu: 0.0.40
codegen_flags: <defaults>
</compile_context>

<pallas_src>
import jax
import jax.numpy as jnp
from jax.experimental import pallas as pl
from jax.experimental.pallas import tpu as pltpu

_LANE = 128
_MAX_COLS = 2048                    # widest lane dimension for the slab
_TARGET_BLOCK_BYTES = 4 << 20       # ~4 MiB per buffer; 4 buffers ~= 16 MiB
_MIN_SPLIT_BYTES = 2 << 20          # above this, force >= 2 grid steps (v7x megacore)
_VMEM_LIMIT_BYTES = 32 * 1024 * 1024

# Native sublane packing per element size (second-to-last block dim multiple).
_SUBLANE = {4: 8, 2: 16, 1: 32}


def _adaptive_silu_kernel(scale_ref, x_ref, o_ref):
    # scale_ref: SMEM (1, 1) holding param * scale_factor (pre-fused, f32).
    s = scale_ref[0, 0]
    z = x_ref[...].astype(jnp.float32) * s
    # SiLU(z) = z * sigmoid(z) = 0.5 * z * (tanh(z/2) + 1):
    # a single EUP push per element instead of exp + reciprocal. Matters only
    # where the per-byte compute budget is tight (v7x); free filler elsewhere.
    o_ref[...] = (0.5 * z * (jnp.tanh(z * 0.5) + 1.0)).astype(o_ref.dtype)


def _plan_slab(n, itemsize):
    """Pick (rows, cols, tile_rows, pad_elems) for an n-element flat array."""
    mult = _SUBLANE.get(itemsize, 8)

    if n % _LANE == 0:
        # Pad-free path: widest divisor of n that is a multiple of 128.
        cols = _LANE
        for k in range(min(n // _LANE, _MAX_COLS // _LANE), 0, -1):
            c = k * _LANE
            if n % c == 0:
                cols = c
                break
        rows = n // cols
        pad = 0
    else:
        # Ragged path: pad only the sub-row tail (< 128 elements).
        cols = _LANE
        rows = -(-n // cols)
        pad = rows * cols - n

    # Largest dtype-sublane-aligned row tile within the per-buffer VMEM budget.
    budget_rows = max(mult, (_TARGET_BLOCK_BYTES // (cols * itemsize)) // mult * mult)

    # v7x megacore: give the "parallel" grid axis >= 2 steps once the input is
    # non-tiny, so both TensorCores get work (neutral on v5e/v6e).
    if rows * cols * itemsize > _MIN_SPLIT_BYTES:
        half_rows = -(-rows // 2)                       # ceil(rows / 2)
        half_rows = -(-half_rows // mult) * mult        # round up to sublane tile
        budget_rows = min(budget_rows, half_rows)

    if budget_rows >= rows:
        tile_rows = rows        # single full-extent block (always layout-legal)
    else:
        tile_rows = budget_rows  # multiple of `mult`; last partial block is masked

    return rows, cols, tile_rows, pad


def adaptive_silu(x, param, scale_factor=1.0):
    """SiLU(param * x * scale_factor), elementwise, via a Pallas TPU kernel."""
    orig_shape = x.shape
    orig_dtype = x.dtype
    if not jnp.issubdtype(orig_dtype, jnp.floating):
        raise TypeError("adaptive_silu expects a floating-point input dtype")

    n = x.size
    itemsize = jnp.dtype(orig_dtype).itemsize
    rows, cols, tile_rows, pad = _plan_slab(n, itemsize)

    if pad:
        x_flat = jnp.reshape(x, (-1,))
        x_flat = jnp.concatenate([x_flat, jnp.zeros((pad,), dtype=orig_dtype)])
        x2d = jnp.reshape(x_flat, (rows, cols))
    else:
        x2d = jnp.reshape(x, (rows, cols))

    # Fuse the learned scalar and the static scale_factor into one f32 scalar.
    scale = (jnp.asarray(param, dtype=jnp.float32)
             * jnp.float32(scale_factor)).reshape(1, 1)

    grid = (pl.cdiv(rows, tile_rows),)
    out2d = pl.pallas_call(
        _adaptive_silu_kernel,
        out_shape=jax.ShapeDtypeStruct((rows, cols), orig_dtype),
        grid_spec=pltpu.PrefetchScalarGridSpec(
            num_scalar_prefetch=0,
            grid=grid,
            in_specs=[
                pl.BlockSpec(memory_space=pltpu.SMEM),              # fused scale (1,1)
                pl.BlockSpec((tile_rows, cols), lambda i: (i, 0)),  # x tile
            ],
            out_specs=pl.BlockSpec((tile_rows, cols), lambda i: (i, 0)),
        ),
        compiler_params=pltpu.CompilerParams(
            dimension_semantics=("parallel",),
            vmem_limit_bytes=_VMEM_LIMIT_BYTES,
        ),
    )(scale, x2d)

    if pad:
        out_flat = jnp.reshape(out2d, (-1,))[:n]
        return jnp.reshape(out_flat, orig_shape)
    return jnp.reshape(out2d, orig_shape)


def adaptive_silu_ref(x, param, scale_factor=1.0):
    z = (jnp.asarray(param, jnp.float32)
         * x.astype(jnp.float32) * jnp.float32(scale_factor))
    return (z * jax.nn.sigmoid(z)).astype(x.dtype)


if __name__ == "__main__":
    key = jax.random.PRNGKey(0)

    # Small NCHW input, consistent with typical conv-activation usage.
    x = jax.random.normal(key, (2, 4, 16, 16), dtype=jnp.float32)
    # PyTorch init: nn.Parameter(torch.tensor(1.0)).
    param = jnp.asarray(1.0, dtype=jnp.float32)
    scale_factor = 1.0

    out = jax.block_until_ready(adaptive_silu(x, param, scale_factor))
    ref = adaptive_silu_ref(x, param, scale_factor)
    assert out.shape == x.shape and out.dtype == x.dtype
    assert jnp.allclose(out, ref, atol=1e-6, rtol=1e-5)

    # Ragged (sub-row padded) path + non-trivial param / scale_factor.
    x2 = jax.random.normal(jax.random.PRNGKey(1), (3, 5, 7), dtype=jnp.float32)
    out2 = jax.block_until_ready(adaptive_silu(x2, 0.75, 2.0))
    ref2 = adaptive_silu_ref(x2, 0.75, 2.0)
    assert out2.shape == x2.shape and out2.dtype == x2.dtype
    assert jnp.allclose(out2, ref2, atol=1e-6, rtol=1e-5)

    # bf16 path (dtype-aware sublane packing; output compared in bf16).
    x3 = jax.random.normal(jax.random.PRNGKey(2), (2, 8, 8, 16), dtype=jnp.bfloat16)
    out3 = jax.block_until_ready(adaptive_silu(x3, 1.25, 0.5))
    ref3 = adaptive_silu_ref(x3, 1.25, 0.5)
    assert out3.shape == x3.shape and out3.dtype == x3.dtype
    assert jnp.allclose(out3.astype(jnp.float32), ref3.astype(jnp.float32),
                        atol=1e-2, rtol=2e-2)

    print("KERNEL_OK")
</pallas_src>

<mosaic_0001>
module attributes {stable_mosaic.version = 11 : i64} {
  func.func @_adaptive_silu_kernel(%arg0: i32, %arg1: memref<1x1xf32, #tpu.memory_space<smem>>, %arg2: memref<1x2048xf32, #tpu.memory_space<vmem>>, %arg3: memref<1x2048xf32, #tpu.memory_space<vmem>>) attributes {dimension_semantics = [#tpu.dimension_semantics<parallel>], iteration_bounds = array<i64: 1>, scalar_prefetch = 0 : i64, scratch_operands = 0 : i64, tpu.core_type = #tpu.core_type<tc>, window_params = [{transform_indices = @transform_0, window_bounds = array<i64: 1, 1>}, {transform_indices = @transform_1, window_bounds = array<i64: 1, 2048>}, {transform_indices = @transform_2, window_bounds = array<i64: 1, 2048>}]} {
    %c0 = arith.constant 0 : index
    %c0_0 = arith.constant 0 : index
    %0 = memref.load %arg1[%c0, %c0_0] : memref<1x1xf32, #tpu.memory_space<smem>>
    %c0_1 = arith.constant 0 : index
    %c0_2 = arith.constant 0 : index
    %1 = vector.load %arg2[%c0_1, %c0_2] : memref<1x2048xf32, #tpu.memory_space<vmem>>, vector<1x2048xf32>
    %2 = vector.broadcast %0 : f32 to vector<1x2048xf32>
    %3 = arith.mulf %1, %2 : vector<1x2048xf32>
    %cst = arith.constant 5.000000e-01 : f32
    %4 = vector.broadcast %cst : f32 to vector<1x2048xf32>
    %5 = arith.mulf %4, %3 : vector<1x2048xf32>
    %cst_3 = arith.constant 5.000000e-01 : f32
    %6 = vector.broadcast %cst_3 : f32 to vector<1x2048xf32>
    %7 = arith.mulf %3, %6 : vector<1x2048xf32>
    %8 = math.tanh %7 : vector<1x2048xf32>
    %cst_4 = arith.constant 1.000000e+00 : f32
    %9 = vector.broadcast %cst_4 : f32 to vector<1x2048xf32>
    %10 = arith.addf %8, %9 : vector<1x2048xf32>
    %11 = arith.mulf %5, %10 : vector<1x2048xf32>
    %c0_5 = arith.constant 0 : index
    %c0_6 = arith.constant 0 : index
    %12 = vector.load %arg3[%c0_5, %c0_6] : memref<1x2048xf32, #tpu.memory_space<vmem>>, vector<1x2048xf32>
    tpu.vector_store %arg3[%c0_5, %c0_6], %11 {strides = array<i32>} : memref<1x2048xf32, #tpu.memory_space<vmem>>, vector<1x2048xf32>,
    return
  }
  func.func @transform_0(%arg0: i32) -> (i32, i32) {
    %c0_i32 = arith.constant 0 : i32
    %c0_i32_0 = arith.constant 0 : i32
    %c0_i32_1 = arith.constant 0 : i32
    return %c0_i32, %c0_i32_0 : i32, i32
  }
  func.func @transform_1(%arg0: i32) -> (i32, i32) {
    %c0_i32 = arith.constant 0 : i32
    %c0_i32_0 = arith.constant 0 : i32
    return %arg0, %c0_i32 : i32, i32
  }
  func.func @transform_2(%arg0: i32) -> (i32, i32) {
    %c0_i32 = arith.constant 0 : i32
    %c0_i32_0 = arith.constant 0 : i32
    return %arg0, %c0_i32 : i32, i32
  }
}

</mosaic_0001>

<llo_original>
// kernel: tpu_custom_call.1
$region0: #{tpu_custom_call.1}
  #allocation0 [shape = 'u32[]', space=smem, size = 0x4, offset = 0x4, fixed_abs, tag = 'smem constant byte address 0x4 - core index']
  #allocation1 [shape = 'u32[144,128]{1,0:T(1,128)}', space=vmem, size = 0x12000, scoped, tag = 'internal scratch']
  #allocation2 [shape = 'f32[1,1]{1,0:T(1,128)S(6)}', space=smem, size = 0x200, scoped, tag = 'scoped memory for tpu_custom_call.1']
  %s0 = inlined_call_operand.<no memory space> [shape: f32[1,1], index: 0, kind: input, shape index: {}]
  %s1 = inlined_call_operand.hbm [shape: f32[1,2048], index: 1, kind: input, shape index: {}]
  %s2 = inlined_call_operand.hbm [shape: f32[1,2048], index: 2, kind: output, shape index: {}]
  %s3 = sld [smem:[#allocation0]]
  $region22: #{tpu_custom_call.1} parent=0
    _
  %s5 = ssub.s32 1, %s3
  %s6 = scalar_select 0, %s5, %s3
  %7 = sst [smem:[#allocation2]] %s0
  $region1: #{tpu_custom_call.1} parent=0
    #allocation3 [shape = 'u8[8192]{0}', space=vmem, size = 0x2000, scoped, tag = 'input window, operand 1, single buffered']
    #allocation4 [shape = 's32[1]{0}', space=sflag, size = 0x4, scoped, tag = 'scoped memory for tpu_custom_call.1']
    #allocation5 [shape = 's32[1]{0}', space=sflag, size = 0x4, scoped, tag = 'scoped memory for tpu_custom_call.1']
    #allocation6 [shape = 'u8[8192]{0}', space=vmem, size = 0x2000, scoped, tag = 'output window, operand 0, single buffered']
    %8 = vsyncpa [#allocation4], 0
    %9 = vsyncpa [#allocation5], 0
    // Predicated region
    $region2: #{tpu_custom_call.1} parent=1 // pred_check
      _
    $region3: #{tpu_custom_call.1} parent=1 // pred_check_branch
      %11 = sbr.rel (0) target = $region5
    $region4: #{tpu_custom_call.1} parent=1 // pred_region
      _
    $region5: #{tpu_custom_call.1} parent=1 // pred_fallthru
      _
    // Predicated region
    $region6: #{tpu_custom_call.1} parent=1 // pred_check
      _
    $region7: #{tpu_custom_call.1} parent=1 // pred_check_branch
      %13 = sbr.rel (0) target = $region9
    $region8: #{tpu_custom_call.1} parent=1 // pred_region
      %s15 = ssub.s32 256, 256
      %16 = vsyncadd [#allocation4], %s15
      %s18 = sshll.u32 [#allocation3], 4
      %s19 = int_to_ptr.vmem [resolvable:$true] %s18
      %21 = dma.hbm_to_vmem [thread:$0]  %s1, 256, %s19, [#allocation4]
    $region9: #{tpu_custom_call.1} parent=1 // pred_fallthru
      _
    // Predicated region
    $region10: #{tpu_custom_call.1} parent=1 // pred_check
      _
    $region11: #{tpu_custom_call.1} parent=1 // pred_check_branch
      %23 = sbr.rel (0) target = $region13
    $region12: #{tpu_custom_call.1} parent=1 // pred_region
      %24 = dma.done [#allocation4], 256
    $region13: #{tpu_custom_call.1} parent=1 // pred_fallthru
      _
    %s25 = sld [smem:[#allocation2]]
    %v26 = vld [vmem:[#allocation3] sm:$0xff]
    %v27 = vld [vmem:[#allocation3 + $0x8] sm:$0xff]
    %v28 = vstv %s25
    %v29 = vmul.f32 %v26, %v28
    %v30 = vmul.f32 %v27, %v28
    %v31 = vmul.f32 %v29, 0.5
    %v32 = vmul.f32 %v30, 0.5
    %v33 = vtanh.pop %v31
    %v34 = vtanh.pop %v32
    %v35 = vadd.f32 %v33, 1.0
    %v36 = vadd.f32 %v34, 1.0
    %v37 = vmul.f32 %v31, %v35
    %v38 = vmul.f32 %v32, %v36
    %39 = vst [vmem:[#allocation6] sm:$0xff] %v37
    %40 = vst [vmem:[#allocation6 + $0x8] sm:$0xff] %v38
    // Predicated region
    $region14: #{tpu_custom_call.1} parent=1 // pred_check
      _
    $region15: #{tpu_custom_call.1} parent=1 // pred_check_branch
      %42 = sbr.rel (0) target = $region17
    $region16: #{tpu_custom_call.1} parent=1 // pred_region
      %s44 = ssub.s32 256, 256
      %45 = vsyncadd [#allocation5], %s44
      %s47 = sshll.u32 [#allocation6], 4
      %s48 = int_to_ptr.vmem [resolvable:$true] %s47
      %50 = dma.vmem_to_hbm [thread:$0]  %s48, 256, %s2, [#allocation5]
    $region17: #{tpu_custom_call.1} parent=1 // pred_fallthru
      _
    // Predicated region
    $region18: #{tpu_custom_call.1} parent=1 // pred_check
      _
    $region19: #{tpu_custom_call.1} parent=1 // pred_check_branch
      %52 = sbr.rel (0) target = $region21
    $region20: #{tpu_custom_call.1} parent=1 // pred_region
      %53 = dma.done [#allocation5], 256
    $region21: #{tpu_custom_call.1} parent=1 // pred_fallthru
      _
    %54 = vsyncpa [#allocation4], 1
    %55 = vsyncpa [#allocation5], 1

</llo_original>
